<compile_context>
chip_gen: v5e
topology: v5e:2x2
jax: 0.10.0
libtpu: 0.0.40
codegen_flags: <defaults>
</compile_context>

<pallas_src>
import functools

import jax
import jax.numpy as jnp
from jax import lax
from jax.experimental import pallas as pl
from jax.experimental.pallas import tpu as pltpu

_LANE = 128
_LOG2E = 1.4426950408889634


def _round_up(n, m):
    return ((n + m - 1) // m) * m


# --------------- Stage 1: fused Q/K/V projection (runs once over x) --------------- #

def _qkv_proj_kernel(x_ref, w_ref, q_ref, k_ref, v_ref, *, q_scale):
    # One MXU push: [ts, d_in_pad] @ [d_in_pad, 3*d_pad], f32 accumulation.
    qkv = jnp.dot(x_ref[...], w_ref[...], preferred_element_type=jnp.float32)
    d = q_ref.shape[-1]
    # Fold 1/sqrt(d_out) * log2(e) into Q once (touches S*d elements, not S^2);
    # the attention kernel then runs its online softmax in base 2 (exp2).
    q_ref[...] = (qkv[:, :d] * q_scale).astype(q_ref.dtype)
    k_ref[...] = qkv[:, d:2 * d].astype(k_ref.dtype)
    v_ref[...] = qkv[:, 2 * d:].astype(v_ref.dtype)


# --------------- Stage 2: flash attention over precomputed Q, K, V --------------- #

def _flash_attn_kernel(q_ref, k_ref, v_ref, o_ref, m_sc, l_sc, acc_sc):
    ki = pl.program_id(1)

    @pl.when(ki == 0)
    def _init():
        m_sc[...] = jnp.full_like(m_sc, -jnp.inf)
        l_sc[...] = jnp.zeros_like(l_sc)
        acc_sc[...] = jnp.zeros_like(acc_sc)

    # Transpose-free QK^T: contract the last dims of both operands (no XLU vxpose).
    # bf16 operands feed the MXU at full rate; accumulation is f32.
    s = lax.dot_general(q_ref[...], k_ref[...],
                        dimension_numbers=(((1,), (1,)), ((), ())),
                        preferred_element_type=jnp.float32)          # [tq, tk]

    # Online (numerically stable) softmax, tracked in base 2; log2(e) is already
    # folded into Q so exp2(s - m) == exp(scaled_scores - max).
    m_prev = m_sc[...]
    m_new = jnp.maximum(m_prev, jnp.max(s, axis=-1, keepdims=True))
    alpha = jnp.exp2(m_prev - m_new)
    p = jnp.exp2(s - m_new)
    l_sc[...] = alpha * l_sc[...] + jnp.sum(p, axis=-1, keepdims=True)
    acc_sc[...] = alpha * acc_sc[...] + jnp.dot(
        p.astype(v_ref.dtype), v_ref[...], preferred_element_type=jnp.float32)
    m_sc[...] = m_new

    @pl.when(ki == pl.num_programs(1) - 1)
    def _finalize():
        inv_l = pl.reciprocal(l_sc[...], approx=True)   # EUP slot, effectively free
        o_ref[...] = (acc_sc[...] * inv_l).astype(o_ref.dtype)


def self_attention_v1(x, w_query, w_key, w_value, *, tq=None, tk=None,
                      compute_dtype=jnp.bfloat16):
    seq_len, d_in = x.shape
    d_out = w_query.shape[-1]
    out_dtype = x.dtype

    # Lane-dense padding of both the head dim (d_out) and the contraction dim (d_in).
    # Zero rows/columns contribute nothing to any matmul; the extra output columns
    # are exactly zero and sliced off below.
    d_pad = _round_up(d_out, _LANE)
    d_in_pad = _round_up(d_in, _LANE)

    x_pad = jnp.pad(x, ((0, 0), (0, d_in_pad - d_in))).astype(compute_dtype)

    def pad_w(w):
        return jnp.pad(w, ((0, d_in_pad - d_in), (0, d_pad - d_out)))

    # Fused QKV weight: single lane-dense [d_in_pad, 3*d_pad] operand.
    w_qkv = jnp.concatenate(
        [pad_w(w_query), pad_w(w_key), pad_w(w_value)], axis=1).astype(compute_dtype)

    # Softmax scale uses the REAL d_out (matches the PyTorch reference), with
    # log2(e) folded in for the exp2 online softmax.
    q_scale = float(d_out) ** -0.5 * _LOG2E

    # Tile sizes: 512 (256-multiples fill the v6e/v7x 256x256 MXU); still only a
    # few MiB of VMEM at bf16, leaving headroom for double-buffering on v5e too.
    if tq is None:
        tq = min(seq_len, 512)
    if tk is None:
        tk = min(seq_len, 512)
    assert seq_len % tq == 0 and seq_len % tk == 0, \
        "seq_len must be divisible by tile sizes"
    # TODO(synk): pad + mask the kv axis to support seq_len not divisible by the tiles.

    # ---- Stage 1: project Q (pre-scaled), K, V once. ----
    ts = min(seq_len, 512)
    assert seq_len % ts == 0
    q, k, v = pl.pallas_call(
        functools.partial(_qkv_proj_kernel, q_scale=q_scale),
        out_shape=(
            jax.ShapeDtypeStruct((seq_len, d_pad), compute_dtype),
            jax.ShapeDtypeStruct((seq_len, d_pad), compute_dtype),
            jax.ShapeDtypeStruct((seq_len, d_pad), compute_dtype),
        ),
        grid_spec=pltpu.PrefetchScalarGridSpec(
            num_scalar_prefetch=0,
            grid=(seq_len // ts,),
            in_specs=[
                pl.BlockSpec((ts, d_in_pad), lambda i: (i, 0)),         # x rows
                pl.BlockSpec((d_in_pad, 3 * d_pad), lambda i: (0, 0)),  # fused W_qkv
            ],
            out_specs=[
                pl.BlockSpec((ts, d_pad), lambda i: (i, 0)),
                pl.BlockSpec((ts, d_pad), lambda i: (i, 0)),
                pl.BlockSpec((ts, d_pad), lambda i: (i, 0)),
            ],
        ),
        compiler_params=pltpu.CompilerParams(
            dimension_semantics=("parallel",),
            vmem_limit_bytes=32 * 1024 * 1024,
        ),
    )(x_pad, w_qkv)

    # ---- Stage 2: flash attention (query tiles parallel, kv tiles reduced). ----
    out_padded = pl.pallas_call(
        _flash_attn_kernel,
        out_shape=jax.ShapeDtypeStruct((seq_len, d_pad), out_dtype),
        grid_spec=pltpu.PrefetchScalarGridSpec(
            num_scalar_prefetch=0,
            grid=(seq_len // tq, seq_len // tk),
            in_specs=[
                pl.BlockSpec((tq, d_pad), lambda qi, ki: (qi, 0)),   # Q (pre-scaled)
                pl.BlockSpec((tk, d_pad), lambda qi, ki: (ki, 0)),   # K
                pl.BlockSpec((tk, d_pad), lambda qi, ki: (ki, 0)),   # V
            ],
            out_specs=pl.BlockSpec((tq, d_pad), lambda qi, ki: (qi, 0)),
            scratch_shapes=[
                pltpu.VMEM((tq, 1), jnp.float32),       # running max (base-2)
                pltpu.VMEM((tq, 1), jnp.float32),       # running denominator
                pltpu.VMEM((tq, d_pad), jnp.float32),   # output accumulator
            ],
        ),
        compiler_params=pltpu.CompilerParams(
            dimension_semantics=("parallel", "arbitrary"),
            vmem_limit_bytes=32 * 1024 * 1024,   # above v5e's 16 MiB scoped default
        ),
    )(q, k, v)

    return out_padded[:, :d_out]


def _reference(x, wq, wk, wv):
    q = x @ wq
    k = x @ wk
    v = x @ wv
    scores = q @ k.T / jnp.sqrt(jnp.float32(k.shape[-1]))
    w = jax.nn.softmax(scores, axis=-1)
    return w @ v


if __name__ == "__main__":
    d_in, d_out = 3, 2
    seq_len = 8

    key = jax.random.PRNGKey(0)
    kx, kq, kk, kv = jax.random.split(key, 4)

    # deterministic init mirroring torch.rand (uniform [0, 1))
    x = jax.random.uniform(kx, (seq_len, d_in), dtype=jnp.float32)
    w_query = jax.random.uniform(kq, (d_in, d_out), dtype=jnp.float32)
    w_key = jax.random.uniform(kk, (d_in, d_out), dtype=jnp.float32)
    w_value = jax.random.uniform(kv, (d_in, d_out), dtype=jnp.float32)

    ref = _reference(x, w_query, w_key, w_value)

    # f32 compute path: tight check of the kernel algorithm (tolerance covers the
    # approx EUP reciprocal in the softmax denominator, ~1e-3 relative).
    out_f32 = jax.block_until_ready(
        self_attention_v1(x, w_query, w_key, w_value, compute_dtype=jnp.float32))
    assert out_f32.shape == (seq_len, d_out)
    assert jnp.allclose(out_f32, ref, atol=5e-3, rtol=5e-3), (out_f32, ref)

    # Default bf16-MXU path (f32 accumulation / f32 softmax stats): perf config.
    out_bf16 = jax.block_until_ready(self_attention_v1(x, w_query, w_key, w_value))
    assert out_bf16.shape == (seq_len, d_out)
    assert jnp.allclose(out_bf16, ref, atol=5e-2, rtol=5e-2), (out_bf16, ref)

    print("KERNEL_OK")
</pallas_src>

<mosaic_0001>
module attributes {stable_mosaic.version = 11 : i64} {
  func.func @_qkv_proj_kernel(%arg0: i32, %arg1: memref<8x128xf32, #tpu.memory_space<vmem>>, %arg2: memref<128x384xf32, #tpu.memory_space<vmem>>, %arg3: memref<8x128xf32, #tpu.memory_space<vmem>>, %arg4: memref<8x128xf32, #tpu.memory_space<vmem>>, %arg5: memref<8x128xf32, #tpu.memory_space<vmem>>) attributes {dimension_semantics = [#tpu.dimension_semantics<parallel>], iteration_bounds = array<i64: 1>, scalar_prefetch = 0 : i64, scratch_operands = 0 : i64, tpu.core_type = #tpu.core_type<tc>, window_params = [{transform_indices = @transform_0, window_bounds = array<i64: 8, 128>}, {pipeline_mode = #tpu.pipeline_mode<synchronous>, transform_indices = @transform_1, window_bounds = array<i64: 128, 384>}, {transform_indices = @transform_2, window_bounds = array<i64: 8, 128>}, {transform_indices = @transform_3, window_bounds = array<i64: 8, 128>}, {transform_indices = @transform_4, window_bounds = array<i64: 8, 128>}]} {
    %c0 = arith.constant 0 : index
    %c0_0 = arith.constant 0 : index
    %0 = vector.load %arg1[%c0, %c0_0] : memref<8x128xf32, #tpu.memory_space<vmem>>, vector<8x128xf32>
    %c0_1 = arith.constant 0 : index
    %c0_2 = arith.constant 0 : index
    %1 = vector.load %arg2[%c0_1, %c0_2] : memref<128x384xf32, #tpu.memory_space<vmem>>, vector<128x384xf32>
    %cst = arith.constant dense<0.000000e+00> : vector<8x384xf32>
    %2 = tpu.matmul %0, %1, %cst {dimension_numbers = #tpu.dot_dimension_numbers<[1], [0], [0], [1], [0, 0, 1, 1], [], []>} : vector<8x128xf32>, vector<128x384xf32>, vector<8x384xf32> -> vector<8x384xf32>
    %3 = vector.extract_strided_slice %2 {offsets = [0, 0], sizes = [8, 128], strides = [1, 1]} : vector<8x384xf32> to vector<8x128xf32>
    %cst_3 = arith.constant 1.02013946 : f32
    %4 = vector.broadcast %cst_3 : f32 to vector<8x128xf32>
    %5 = arith.mulf %3, %4 : vector<8x128xf32>
    %c0_4 = arith.constant 0 : index
    %c0_5 = arith.constant 0 : index
    %6 = vector.load %arg3[%c0_4, %c0_5] : memref<8x128xf32, #tpu.memory_space<vmem>>, vector<8x128xf32>
    tpu.vector_store %arg3[%c0_4, %c0_5], %5 {strides = array<i32>} : memref<8x128xf32, #tpu.memory_space<vmem>>, vector<8x128xf32>,
    %7 = vector.extract_strided_slice %2 {offsets = [0, 128], sizes = [8, 128], strides = [1, 1]} : vector<8x384xf32> to vector<8x128xf32>
    %c0_6 = arith.constant 0 : index
    %c0_7 = arith.constant 0 : index
    %8 = vector.load %arg4[%c0_6, %c0_7] : memref<8x128xf32, #tpu.memory_space<vmem>>, vector<8x128xf32>
    tpu.vector_store %arg4[%c0_6, %c0_7], %7 {strides = array<i32>} : memref<8x128xf32, #tpu.memory_space<vmem>>, vector<8x128xf32>,
    %9 = vector.extract_strided_slice %2 {offsets = [0, 256], sizes = [8, 128], strides = [1, 1]} : vector<8x384xf32> to vector<8x128xf32>
    %c0_8 = arith.constant 0 : index
    %c0_9 = arith.constant 0 : index
    %10 = vector.load %arg5[%c0_8, %c0_9] : memref<8x128xf32, #tpu.memory_space<vmem>>, vector<8x128xf32>
    tpu.vector_store %arg5[%c0_8, %c0_9], %9 {strides = array<i32>} : memref<8x128xf32, #tpu.memory_space<vmem>>, vector<8x128xf32>,
    return
  }
  func.func @transform_0(%arg0: i32) -> (i32, i32) {
    %c0_i32 = arith.constant 0 : i32
    %c0_i32_0 = arith.constant 0 : i32
    return %arg0, %c0_i32 : i32, i32
  }
  func.func @transform_1(%arg0: i32) -> (i32, i32) {
    %c0_i32 = arith.constant 0 : i32
    %c0_i32_0 = arith.constant 0 : i32
    %c0_i32_1 = arith.constant 0 : i32
    return %c0_i32, %c0_i32_0 : i32, i32
  }
  func.func @transform_2(%arg0: i32) -> (i32, i32) {
    %c0_i32 = arith.constant 0 : i32
    %c0_i32_0 = arith.constant 0 : i32
    return %arg0, %c0_i32 : i32, i32
  }
  func.func @transform_3(%arg0: i32) -> (i32, i32) {
    %c0_i32 = arith.constant 0 : i32
    %c0_i32_0 = arith.constant 0 : i32
    return %arg0, %c0_i32 : i32, i32
  }
  func.func @transform_4(%arg0: i32) -> (i32, i32) {
    %c0_i32 = arith.constant 0 : i32
    %c0_i32_0 = arith.constant 0 : i32
    return %arg0, %c0_i32 : i32, i32
  }
}

</mosaic_0001>

<llo_original>
// kernel: tpu_custom_call.1
$region0: #{tpu_custom_call.1}
  #allocation0 [shape = 'u32[]', space=smem, size = 0x4, offset = 0x4, fixed_abs, tag = 'smem constant byte address 0x4 - core index']
  #allocation1 [shape = 'u32[72,128]{1,0:T(1,128)}', space=vmem, size = 0x9000, scoped, tag = 'internal scratch']
  %s0 = inlined_call_operand.hbm [shape: f32[8,128], index: 0, kind: input, shape index: {}]
  %s1 = inlined_call_operand.hbm [shape: f32[128,384], index: 1, kind: input, shape index: {}]
  %s2 = inlined_call_operand.hbm [shape: f32[8,128], index: 2, kind: output, shape index: {0}]
  %s3 = inlined_call_operand.hbm [shape: f32[8,128], index: 3, kind: output, shape index: {1}]
  %s4 = inlined_call_operand.hbm [shape: f32[8,128], index: 4, kind: output, shape index: {2}]
  %5 = xla_tuple %s2, %s3, %s4
  %s6 = sld [smem:[#allocation0]]
  $region42: #{tpu_custom_call.1} parent=0
    _
  %s8 = ssub.s32 1, %s6
  %s9 = scalar_select 0, %s8, %s6
  $region1: #{tpu_custom_call.1} parent=0
    #allocation2 [shape = 'u8[4096]{0}', space=vmem, size = 0x1000, scoped, tag = 'input window, operand 0, single buffered']
    #allocation3 [shape = 's32[1]{0}', space=sflag, size = 0x4, scoped, tag = 'scoped memory for tpu_custom_call.1']
    #allocation4 [shape = 's32[1]{0}', space=sflag, size = 0x4, scoped, tag = 'scoped memory for tpu_custom_call.1']
    #allocation5 [shape = 'u8[196608]{0}', space=vmem, size = 0x30000, scoped, tag = 'input window, operand 1, single buffered']
    #allocation6 [shape = 's32[1]{0}', space=sflag, size = 0x4, scoped, tag = 'scoped memory for tpu_custom_call.1']
    #allocation7 [shape = 'u8[4096]{0}', space=vmem, size = 0x1000, scoped, tag = 'output window, operand 0, single buffered']
    #allocation8 [shape = 'u8[4096]{0}', space=vmem, size = 0x1000, scoped, tag = 'output window, operand 1, single buffered']
    #allocation9 [shape = 's32[1]{0}', space=sflag, size = 0x4, scoped, tag = 'scoped memory for tpu_custom_call.1']
    #allocation10 [shape = 'u8[4096]{0}', space=vmem, size = 0x1000, scoped, tag = 'output window, operand 2, single buffered']
    %10 = vsyncpa [#allocation3], 0
    %11 = vsyncpa [#allocation6], 0
    %12 = vsyncpa [#allocation4], 0
    %13 = vsyncpa [#allocation9], 0
    // Predicated region
    $region2: #{tpu_custom_call.1} parent=1 // pred_check
      _
    $region3: #{tpu_custom_call.1} parent=1 // pred_check_branch
      %15 = sbr.rel (0) target = $region5
    $region4: #{tpu_custom_call.1} parent=1 // pred_region
      %17 = vsyncadd [#allocation3], 0
      %s19 = sshll.u32 %s0, 4
      %s20 = int_to_ptr.hbm [resolvable:$true] %s19
      %s21 = sshll.u32 [#allocation2], 4
      %s22 = int_to_ptr.vmem [resolvable:$true] %s21
      %24 = dma.hbm_to_vmem [thread:$0]  %s20, 128, %s22, [#allocation3]
    $region5: #{tpu_custom_call.1} parent=1 // pred_fallthru
      _
    // Predicated region
    $region6: #{tpu_custom_call.1} parent=1 // pred_check
      _
    $region7: #{tpu_custom_call.1} parent=1 // pred_check_branch
      %26 = sbr.rel (0) target = $region9
    $region8: #{tpu_custom_call.1} parent=1 // pred_region
      %28 = vsyncadd [#allocation6], 0
      %s29 = sshll.u32 %s1, 4
      %s30 = int_to_ptr.hbm [resolvable:$true] %s29
      %s31 = sshll.u32 [#allocation5], 4
      %s32 = int_to_ptr.vmem [resolvable:$true] %s31
      %37 = dma.hbm_to_vmem [thread:$0]  %s30, 6144, %s32, [#allocation6], 384, 384, 24
    $region9: #{tpu_custom_call.1} parent=1 // pred_fallthru
      _
    // Predicated region
    $region10: #{tpu_custom_call.1} parent=1 // pred_check
      _
    $region11: #{tpu_custom_call.1} parent=1 // pred_check_branch
      %39 = sbr.rel (0) target = $region13
    $region12: #{tpu_custom_call.1} parent=1 // pred_region
      %41 = dma.done [#allocation3], 128
    $region13: #{tpu_custom_call.1} parent=1 // pred_fallthru
      _
    // Predicated region
    $region14: #{tpu_custom_call.1} parent=1 // pred_check
      _
    $region15: #{tpu_custom_call.1} parent=1 // pred_check_branch
      %43 = sbr.rel (0) target = $region17
    $region16: #{tpu_custom_call.1} parent=1 // pred_region
      %45 = dma.done [#allocation6], 6144
    $region17: #{tpu_custom_call.1} parent=1 // pred_fallthru
      _
    %v46 = vld [vmem:[#allocation2] sm:$0xff]
    %v47 = vld [vmem:[#allocation5] sm:$0xff]
    %v48 = vld [vmem:[#allocation5 + $0x8] sm:$0xff]
    %v49 = vld [vmem:[#allocation5 + $0x10] sm:$0xff]
    %v50 = vld [vmem:[#allocation5 + $0x18] sm:$0xff]
    %v51 = vld [vmem:[#allocation5 + $0x20] sm:$0xff]
    %v52 = vld [vmem:[#allocation5 + $0x28] sm:$0xff]
    %v53 = vld [vmem:[#allocation5 + $0x30] sm:$0xff]
    %v54 = vld [vmem:[#allocation5 + $0x38] sm:$0xff]
    %v55 = vld [vmem:[#allocation5 + $0x40] sm:$0xff]
    %v56 = vld [vmem:[#allocation5 + $0x48] sm:$0xff]
    %v57 = vld [vmem:[#allocation5 + $0x50] sm:$0xff]
    %v58 = vld [vmem:[#allocation5 + $0x58] sm:$0xff]
    %v59 = vld [vmem:[#allocation5 + $0x60] sm:$0xff]
    %v60 = vld [vmem:[#allocation5 + $0x68] sm:$0xff]
    %v61 = vld [vmem:[#allocation5 + $0x70] sm:$0xff]
    %v62 = vld [vmem:[#allocation5 + $0x78] sm:$0xff]
    %v63 = vld [vmem:[#allocation5 + $0x80] sm:$0xff]
    %v64 = vld [vmem:[#allocation5 + $0x88] sm:$0xff]
    %v65 = vld [vmem:[#allocation5 + $0x90] sm:$0xff]
    %v66 = vld [vmem:[#allocation5 + $0x98] sm:$0xff]
    %v67 = vld [vmem:[#allocation5 + $0xa0] sm:$0xff]
    %v68 = vld [vmem:[#allocation5 + $0xa8] sm:$0xff]
    %v69 = vld [vmem:[#allocation5 + $0xb0] sm:$0xff]
    %v70 = vld [vmem:[#allocation5 + $0xb8] sm:$0xff]
    %v71 = vld [vmem:[#allocation5 + $0xc0] sm:$0xff]
    %v72 = vld [vmem:[#allocation5 + $0xc8] sm:$0xff]
    %v73 = vld [vmem:[#allocation5 + $0xd0] sm:$0xff]
    %v74 = vld [vmem:[#allocation5 + $0xd8] sm:$0xff]
    %v75 = vld [vmem:[#allocation5 + $0xe0] sm:$0xff]
    %v76 = vld [vmem:[#allocation5 + $0xe8] sm:$0xff]
    %v77 = vld [vmem:[#allocation5 + $0xf0] sm:$0xff]
    %v78 = vld [vmem:[#allocation5 + $0xf8] sm:$0xff]
    %v79 = vld [vmem:[#allocation5 + $0x100] sm:$0xff]
    %v80 = vld [vmem:[#allocation5 + $0x108] sm:$0xff]
    %v81 = vld [vmem:[#allocation5 + $0x110] sm:$0xff]
    %v82 = vld [vmem:[#allocation5 + $0x118] sm:$0xff]
    %v83 = vld [vmem:[#allocation5 + $0x120] sm:$0xff]
    %v84 = vld [vmem:[#allocation5 + $0x128] sm:$0xff]
    %v85 = vld [vmem:[#allocation5 + $0x130] sm:$0xff]
    %v86 = vld [vmem:[#allocation5 + $0x138] sm:$0xff]
    %v87 = vld [vmem:[#allocation5 + $0x140] sm:$0xff]
    %v88 = vld [vmem:[#allocation5 + $0x148] sm:$0xff]
    %v89 = vld [vmem:[#allocation5 + $0x150] sm:$0xff]
    %v90 = vld [vmem:[#allocation5 + $0x158] sm:$0xff]
    %v91 = vld [vmem:[#allocation5 + $0x160] sm:$0xff]
    %v92 = vld [vmem:[#allocation5 + $0x168] sm:$0xff]
    %v93 = vld [vmem:[#allocation5 + $0x170] sm:$0xff]
    %v94 = vld [vmem:[#allocation5 + $0x178] sm:$0xff]
    %95 = vmatpush.msra.mxu0 %v92
    %96 = vmatpush.msra.mxu0 %v89
    %97 = vmatpush.msra.mxu0 %v86
    %98 = vmatpush.msra.mxu0 %v83
    %99 = vmatpush.msra.mxu0 %v80
    %100 = vmatpush.msra.mxu0 %v77
    %101 = vmatpush.msra.mxu0 %v74
    %102 = vmatpush.msra.mxu0 %v71
    %103 = vmatpush.msra.mxu0 %v68
    %104 = vmatpush.msra.mxu0 %v65
    %105 = vmatpush.msra.mxu0 %v62
    %106 = vmatpush.msra.mxu0 %v59
    %107 = vmatpush.msra.mxu0 %v56
    %108 = vmatpush.msra.mxu0 %v53
    %109 = vmatpush.msra.mxu0 %v50
    %110 = vmatpush.msra.mxu0 %v47
    %111 = vmatmul.f32.gmra.mxu0 %v46
    %v112 = vpop.f32.mrf.mxu0
    %v113 = vadd.f32 0.0, %v112
    %114 = vdwg.mxu0
    %115 = vmatpush.msra.mxu0 %v93
    %116 = vmatpush.msra.mxu0 %v90
    %117 = vmatpush.msra.mxu0 %v87
    %118 = vmatpush.msra.mxu0 %v84
    %119 = vmatpush.msra.mxu0 %v81
    %120 = vmatpush.msra.mxu0 %v78
    %121 = vmatpush.msra.mxu0 %v75
    %122 = vmatpush.msra.mxu0 %v72
    %123 = vmatpush.msra.mxu0 %v69
    %124 = vmatpush.msra.mxu0 %v66
    %125 = vmatpush.msra.mxu0 %v63
    %126 = vmatpush.msra.mxu0 %v60
    %127 = vmatpush.msra.mxu0 %v57
    %128 = vmatpush.msra.mxu0 %v54
    %129 = vmatpush.msra.mxu0 %v51
    %130 = vmatpush.msra.mxu0 %v48
    %131 = vmatmul.f32.gmra.mxu0 %v46
    %v132 = vpop.f32.mrf.mxu0
    %v133 = vadd.f32 0.0, %v132
    %134 = vdwg.mxu0
    %135 = vmatpush.msra.mxu0 %v94
    %136 = vmatpush.msra.mxu0 %v91
    %137 = vmatpush.msra.mxu0 %v88
    %138 = vmatpush.msra.mxu0 %v85
    %139 = vmatpush.msra.mxu0 %v82
    %140 = vmatpush.msra.mxu0 %v79
    %141 = vmatpush.msra.mxu0 %v76
    %142 = vmatpush.msra.mxu0 %v73
    %143 = vmatpush.msra.mxu0 %v70
    %144 = vmatpush.msra.mxu0 %v67
    %145 = vmatpush.msra.mxu0 %v64
    %146 = vmatpush.msra.mxu0 %v61
    %147 = vmatpush.msra.mxu0 %v58
    %148 = vmatpush.msra.mxu0 %v55
    %149 = vmatpush.msra.mxu0 %v52
    %150 = vmatpush.msra.mxu0 %v49
    %151 = vmatmul.f32.gmra.mxu0 %v46
    %v152 = vpop.f32.mrf.mxu0
    %v153 = vadd.f32 0.0, %v152
    %154 = vdwg.mxu0
    %v155 = vmul.f32 %v113, 1.0201395
    %156 = vst [vmem:[#allocation7] sm:$0xff] %v155
    %157 = vst [vmem:[#allocation8] sm:$0xff] %v133
    %158 = vst [vmem:[#allocation10] sm:$0xff] %v153
    // Predicated region
    $region18: #{tpu_custom_call.1} parent=1 // pred_check
      _
    $region19: #{tpu_custom_call.1} parent=1 // pred_check_branch
      %160 = sbr.rel (0) target = $region21
    $region20: #{tpu_custom_call.1} parent=1 // pred_region
      %162 = vsyncadd [#allocation4], 0
      %s164 = sshll.u32 [#allocation7], 4
      %s165 = int_to_ptr.vmem [resolvable:$true] %s164
      %s166 = sshll.u32 %s2, 4
      %s167 = int_to_ptr.hbm [resolvable:$true] %s166
      %169 = dma.vmem_to_hbm [thread:$0]  %s165, 128, %s167, [#allocation4]
    $region21: #{tpu_custom_call.1} parent=1 // pred_fallthru
      _
    // Predicated region
    $region22: #{tpu_custom_call.1} parent=1 // pred_check
      _
    $region23: #{tpu_custom_call.1} parent=1 // pred_check_branch
      %171 = sbr.rel (0) target = $region25
    $region24: #{tpu_custom_call.1} parent=1 // pred_region
      %173 = vsyncadd [#allocation9], 0
      %s175 = sshll.u32 [#allocation8], 4
      %s176 = int_to_ptr.vmem [resolvable:$true] %s175
      %s177 = sshll.u32 %s3, 4
      %s178 = int_to_ptr.hbm [resolvable:$true] %s177
      %180 = dma.vmem_to_hbm [thread:$0]  %s176, 128, %s178, [#allocation9]
    $region25: #{tpu_custom_call.1} parent=1 // pred_fallthru
      _
    // Predicated region
    $region26: #{tpu_custom_call.1} parent=1 // pred_check
      _
    $region27: #{tpu_custom_call.1} parent=1 // pred_check_branch
      %182 = sbr.rel (0) target = $region29
    $region28: #{tpu_custom_call.1} parent=1 // pred_region
      %184 = vsyncadd [#allocation9], 0
      %s186 = sshll.u32 [#allocation10], 4
      %s187 = int_to_ptr.vmem [resolvable:$true] %s186
      %s188 = sshll.u32 %s4, 4
      %s189 = int_to_ptr.hbm [resolvable:$true] %s188
      %191 = dma.vmem_to_hbm [thread:$0]  %s187, 128, %s189, [#allocation9]
    $region29: #{tpu_custom_call.1} parent=1 // pred_fallthru
      _
    // Predicated region
    $region30: #{tpu_custom_call.1} parent=1 // pred_check
      _
    $region31: #{tpu_custom_call.1} parent=1 // pred_check_branch
      %193 = sbr.rel (0) target = $region33
    $region32: #{tpu_custom_call.1} parent=1 // pred_region
      %195 = dma.done [#allocation4], 128
    $region33: #{tpu_custom_call.1} parent=1 // pred_fallthru
      _
    // Predicated region
    $region34: #{tpu_custom_call.1} parent=1 // pred_check
      _
    $region35: #{tpu_custom_call.1} parent=1 // pred_check_branch
      %197 = sbr.rel (0) target = $region37
    $region36: #{tpu_custom_call.1} parent=1 // pred_region
      %199 = dma.done [#allocation9], 128
    $region37: #{tpu_custom_call.1} parent=1 // pred_fallthru
      _
    // Predicated region
    $region38: #{tpu_custom_call.1} parent=1 // pred_check
      _
    $region39: #{tpu_custom_call.1} parent=1 // pred_check_branch
      %201 = sbr.rel (0) target = $region41
    $region40: #{tpu_custom_call.1} parent=1 // pred_region
      %203 = dma.done [#allocation9], 128
    $region41: #{tpu_custom_call.1} parent=1 // pred_fallthru
      _
    %204 = vsyncpa [#allocation3], 1
    %205 = vsyncpa [#allocation6], 1
    %206 = vsyncpa [#allocation4], 1
    %207 = vsyncpa [#allocation9], 1

</llo_original>
